<compile_context>
chip_gen: v7x
topology: tpu7x:2x2x1
jax: 0.10.0
libtpu: 0.0.40
codegen_flags: <defaults>
</compile_context>

<pallas_src>
import jax
import jax.numpy as jnp
from jax.experimental import pallas as pl
from jax.experimental.pallas import tpu as pltpu

_LANE = 128
_T_TILE_MAX = 2048        # roofline saturates by 512-1024 lanes; bigger only hurts pipelining
_VMEM_FRACTION = 0.60     # fraction of this generation's per-core VMEM used as pipeline budget


def _pointwise_conv1d_kernel(x_ref, w_ref, b_ref, o_ref):
    """One (batch, time-tile) grid step: out_tile = W @ x_tile + bias.

    x_ref: (1, C_in, Tt)   w_ref: (C_out, C_in)   b_ref: (C_out, 1) f32
    o_ref: (1, C_out, Tt)
    """
    w = w_ref[...]
    # In-kernel cast (review): x streams from HBM in its resident dtype; the
    # cast to the compute dtype is fused VPU work here instead of a separate
    # full read+write XLA pass over x before the kernel.
    x = x_ref[0].astype(w.dtype)
    acc = jnp.dot(w, x, preferred_element_type=jnp.float32)   # MXU, f32 accumulation
    o_ref[0] = (acc + b_ref[...]).astype(o_ref.dtype)


def _vmem_capacity_bytes():
    """Per-core VMEM capacity for the current TPU generation (safe fallback: 64 MiB)."""
    try:
        info = pltpu.get_tpu_info()
        cap = getattr(info, "vmem_capacity_bytes", None)
        if cap:
            return int(cap)
    except Exception:
        pass
    return 64 * 1024 * 1024   # v7x per-TC size; conservative for v5e/v6e


def _choose_t_tile(t_total, c_in, c_out, x_isz, w_isz, out_isz, batch, vmem_cap):
    """Lane-aligned time tile: fits the generation-aware VMEM budget *and*
    guarantees several grid steps for DMA/compute overlap (and, for batch==1,
    enough time tiles for both v7x TensorCores)."""
    if t_total <= _LANE:
        return t_total   # single full-extent block (always layout-legal)

    # Pipeline budget: ~60% of this chip's VMEM minus the resident
    # (double-buffered) weight + bias footprint.
    budget = int(_VMEM_FRACTION * vmem_cap) - 2 * (c_out * c_in * w_isz + 4 * c_out)
    budget = max(budget, 2 * 1024 * 1024)
    # Per time column: double-buffered x and out tiles + f32 accumulator row.
    per_col = 2 * (c_in * x_isz + c_out * out_isz) + 4 * c_out
    tile = (max(budget // per_col, _LANE) // _LANE) * _LANE

    # Guarantee >= ~4 grid steps (>= ~8 when batch==1 so the time axis alone
    # can feed both v7x TensorCores and keep the DMA pipeline busy).
    target_steps = 8 if batch == 1 else 4
    steps_tile = ((-(-t_total // target_steps) + _LANE - 1) // _LANE) * _LANE
    steps_tile = max(steps_tile, _LANE)

    return max(min(tile, steps_tile, _T_TILE_MAX), _LANE)


def pointwise_conv1d(x, weight, bias=None, stride: int = 1, padding: int = 0,
                     t_tile=None, compute_dtype=None, out_dtype=None):
    """Pointwise (kernel_size=1) Conv1d matching torch.nn.Conv1d semantics.

    x: (B, C_in, T_in); weight: (C_out, C_in) or (C_out, C_in, 1); bias: (C_out,) or None.
    Returns (B, C_out, T_out) with T_out = (T_in + 2*padding - 1)//stride + 1.
    """
    if weight.ndim == 3:
        weight = weight[..., 0]
    B, C_in, T_in = x.shape
    C_out = weight.shape[0]
    out_dtype = x.dtype if out_dtype is None else jnp.dtype(out_dtype)
    compute_dtype = x.dtype if compute_dtype is None else jnp.dtype(compute_dtype)

    # PyTorch Conv1d(k=1): output column t reads input index t*stride - padding.
    T_out = (T_in + 2 * padding - 1) // stride + 1
    if padding > 0:
        t_first = -(-padding // stride)                      # ceil(padding / stride)
        t_last = min((T_in - 1 + padding) // stride, T_out - 1)
    else:
        t_first, t_last = 0, T_out - 1
    n_valid = max(t_last - t_first + 1, 0)

    bias_vec = (jnp.zeros((C_out,), jnp.float32) if bias is None
                else bias.astype(jnp.float32))

    if n_valid == 0:
        # Degenerate: every output column only sees zero padding -> pure bias.
        return jnp.broadcast_to(bias_vec.astype(out_dtype)[None, :, None],
                                (B, C_out, T_out))

    i0 = t_first * stride - padding
    if stride > 1:
        # TODO(synk): stride>1 is a cold path for this module; fold the stride
        # subsample into the kernel (manual DMA with pl.ds(..., stride=) on an
        # ANY-space x) to drop this extra XLA pass if it ever becomes hot.
        x_valid = jax.lax.slice(x, (0, 0, i0),
                                (B, C_in, i0 + (n_valid - 1) * stride + 1),
                                (1, 1, stride))
    else:
        # stride == 1: i0 == 0 and n_valid == T_in for any padding, so the
        # kernel streams x straight from HBM -- no slice, no copy.
        x_valid = x

    w = weight.astype(compute_dtype)            # tiny, VMEM-resident across all steps
    bias2d = bias_vec.reshape(C_out, 1)

    x_isz = jnp.dtype(x_valid.dtype).itemsize
    w_isz = jnp.dtype(compute_dtype).itemsize
    out_isz = jnp.dtype(out_dtype).itemsize
    vmem_cap = _vmem_capacity_bytes()

    if t_tile is None:
        t_tile = _choose_t_tile(n_valid, C_in, C_out, x_isz, w_isz, out_isz, B, vmem_cap)
    elif int(t_tile) < n_valid:
        t_tile = max((int(t_tile) // _LANE) * _LANE, _LANE)  # keep tiles lane-aligned
    else:
        t_tile = n_valid
    grid_t = -(-n_valid // t_tile)

    # Scoped-VMEM limit: double-buffered x/out tiles + f32 accumulator +
    # double-buffered weight/bias, clamped to this generation's capacity.
    vmem_needed = (2 * (C_in * x_isz + C_out * out_isz) * t_tile
                   + 4 * C_out * t_tile
                   + 2 * (C_out * C_in * w_isz + 4 * C_out))
    vmem_limit = int(min(max(int(1.5 * vmem_needed), 32 * 1024 * 1024),
                         int(0.85 * vmem_cap)))

    cost = pl.CostEstimate(
        flops=2 * B * C_out * C_in * n_valid,
        transcendentals=0,
        bytes_accessed=(B * C_in * n_valid * x_isz          # x read (HBM-resident dtype)
                        + C_out * C_in * w_isz              # weight read
                        + B * C_out * n_valid * out_isz),   # output write
    )

    grid_spec = pltpu.PrefetchScalarGridSpec(
        num_scalar_prefetch=0,
        grid=(B, grid_t),
        in_specs=[
            pl.BlockSpec((1, C_in, t_tile), lambda b, t: (b, 0, t)),   # streamed x tile
            # TODO(synk): pipeline_mode=pl.Buffered(1) on the constant-index
            # weight/bias and pl.Buffered(3) on the streamed x/out tiles are
            # further VMEM / latency levers; left at default double-buffering
            # for maximum lowering portability across generations.
            pl.BlockSpec((C_out, C_in), lambda b, t: (0, 0)),          # resident weight
            pl.BlockSpec((C_out, 1), lambda b, t: (0, 0)),             # resident bias (f32)
        ],
        out_specs=pl.BlockSpec((1, C_out, t_tile), lambda b, t: (b, 0, t)),
    )

    out_core = pl.pallas_call(
        _pointwise_conv1d_kernel,
        out_shape=jax.ShapeDtypeStruct((B, C_out, n_valid), out_dtype),
        grid_spec=grid_spec,
        compiler_params=pltpu.CompilerParams(
            dimension_semantics=("parallel", "parallel"),
            vmem_limit_bytes=vmem_limit,
        ),
        cost_estimate=cost,
    )(x_valid, w, bias2d)

    if t_first == 0 and t_last == T_out - 1:
        return out_core

    # padding > 0 (cold path): output columns that only see zero padding are
    # bias-only.  TODO(synk): write these <=padding edge columns from inside the
    # kernel via an element-offset out_spec to drop this concatenate's extra
    # output pass through HBM.
    edge = bias_vec.astype(out_dtype)[None, :, None]
    pieces = []
    if t_first > 0:
        pieces.append(jnp.broadcast_to(edge, (B, C_out, t_first)))
    pieces.append(out_core)
    if t_last < T_out - 1:
        pieces.append(jnp.broadcast_to(edge, (B, C_out, T_out - 1 - t_last)))
    return jnp.concatenate(pieces, axis=-1)


if __name__ == "__main__":
    key = jax.random.PRNGKey(0)
    k_x, k_w, k_b, k_x2 = jax.random.split(key, 4)

    # --- Case 1: module defaults (stride=1, padding=0), small shapes ---
    B, C_in, C_out, T = 2, 4, 8, 16
    x = jax.random.normal(k_x, (B, C_in, T), dtype=jnp.float32)
    bound = 1.0 / (C_in ** 0.5)
    weight = jax.random.uniform(k_w, (C_out, C_in), minval=-bound, maxval=bound,
                                dtype=jnp.float32)
    bias = jax.random.uniform(k_b, (C_out,), minval=-bound, maxval=bound,
                              dtype=jnp.float32)

    out = jax.block_until_ready(pointwise_conv1d(x, weight, bias))
    ref = jnp.einsum("oc,bct->bot", weight, x) + bias[None, :, None]
    assert out.shape == (B, C_out, T)
    assert jnp.allclose(out, ref, atol=1e-5, rtol=1e-5)

    # --- Case 2: batch=1 auto-tiling path (>=2 time tiles, partial last tile) ---
    B2, C_in2, C_out2, T2 = 1, 8, 16, 320          # 320 -> tiles of 128, last one partial
    x2 = jax.random.normal(k_x2, (B2, C_in2, T2), dtype=jnp.float32)
    w2 = jax.random.uniform(k_w, (C_out2, C_in2), minval=-0.3, maxval=0.3,
                            dtype=jnp.float32)
    b2 = jax.random.uniform(k_b, (C_out2,), minval=-0.3, maxval=0.3,
                            dtype=jnp.float32)
    out2 = jax.block_until_ready(pointwise_conv1d(x2, w2, b2))
    ref2 = jnp.einsum("oc,bct->bot", w2, x2) + b2[None, :, None]
    assert out2.shape == (B2, C_out2, T2)
    assert jnp.allclose(out2, ref2, atol=1e-4, rtol=1e-4)

    # --- Case 3: stride=2, padding=1 (edge columns are bias-only; no jnp.pad of x) ---
    out3 = jax.block_until_ready(pointwise_conv1d(x, weight, bias, stride=2, padding=1))
    x_pad = jnp.pad(x, ((0, 0), (0, 0), (1, 1)))[:, :, ::2]
    ref3 = jnp.einsum("oc,bct->bot", weight, x_pad) + bias[None, :, None]
    assert out3.shape == ref3.shape
    assert jnp.allclose(out3, ref3, atol=1e-5, rtol=1e-5)

    # --- Case 4: bf16 compute path (in-kernel cast of streamed f32 x), f32 output ---
    out4 = jax.block_until_ready(
        pointwise_conv1d(x, weight, bias, compute_dtype=jnp.bfloat16,
                         out_dtype=jnp.float32))
    assert out4.shape == (B, C_out, T)
    assert jnp.allclose(out4, ref, atol=5e-2, rtol=5e-2)

    print("KERNEL_OK")
</pallas_src>

<mosaic_0001>
module attributes {stable_mosaic.version = 11 : i64} {
  func.func @_pointwise_conv1d_kernel(%arg0: i32, %arg1: i32, %arg2: memref<1x4x16xf32, #tpu.memory_space<vmem>>, %arg3: memref<8x4xf32, #tpu.memory_space<vmem>>, %arg4: memref<8x1xf32, #tpu.memory_space<vmem>>, %arg5: memref<1x8x16xf32, #tpu.memory_space<vmem>>) attributes {dimension_semantics = [#tpu.dimension_semantics<parallel>, #tpu.dimension_semantics<parallel>], iteration_bounds = array<i64: 2, 1>, scalar_prefetch = 0 : i64, scratch_operands = 0 : i64, tpu.core_type = #tpu.core_type<tc>, window_params = [{transform_indices = @transform_0, window_bounds = array<i64: 1, 4, 16>}, {pipeline_mode = #tpu.pipeline_mode<synchronous>, transform_indices = @transform_1, window_bounds = array<i64: 8, 4>}, {pipeline_mode = #tpu.pipeline_mode<synchronous>, transform_indices = @transform_2, window_bounds = array<i64: 8, 1>}, {transform_indices = @transform_3, window_bounds = array<i64: 1, 8, 16>}]} {
    %c0 = arith.constant 0 : index
    %c0_0 = arith.constant 0 : index
    %0 = vector.load %arg3[%c0, %c0_0] : memref<8x4xf32, #tpu.memory_space<vmem>>, vector<8x4xf32>
    %c0_1 = arith.constant 0 : index
    %c0_2 = arith.constant 0 : index
    %c0_3 = arith.constant 0 : index
    %1 = vector.load %arg2[%c0_1, %c0_2, %c0_3] : memref<1x4x16xf32, #tpu.memory_space<vmem>>, vector<1x4x16xf32>
    %2 = vector.shape_cast %1 : vector<1x4x16xf32> to vector<4x16xf32>
    %cst = arith.constant dense<0.000000e+00> : vector<8x16xf32>
    %3 = tpu.matmul %0, %2, %cst {dimension_numbers = #tpu.dot_dimension_numbers<[1], [0], [0], [1], [0, 0, 1, 1], [], []>} : vector<8x4xf32>, vector<4x16xf32>, vector<8x16xf32> -> vector<8x16xf32>
    %c0_4 = arith.constant 0 : index
    %c0_5 = arith.constant 0 : index
    %4 = vector.load %arg4[%c0_4, %c0_5] : memref<8x1xf32, #tpu.memory_space<vmem>>, vector<8x1xf32>
    %5 = vector.broadcast %4 : vector<8x1xf32> to vector<8x16xf32>
    %6 = arith.addf %3, %5 : vector<8x16xf32>
    %c0_6 = arith.constant 0 : index
    %c0_7 = arith.constant 0 : index
    %c0_8 = arith.constant 0 : index
    %7 = vector.load %arg5[%c0_6, %c0_7, %c0_8] : memref<1x8x16xf32, #tpu.memory_space<vmem>>, vector<1x8x16xf32>
    %8 = vector.shape_cast %7 : vector<1x8x16xf32> to vector<8x16xf32>
    %9 = vector.shape_cast %6 : vector<8x16xf32> to vector<1x8x16xf32>
    tpu.vector_store %arg5[%c0_6, %c0_7, %c0_8], %9 {strides = array<i32>} : memref<1x8x16xf32, #tpu.memory_space<vmem>>, vector<1x8x16xf32>,
    return
  }
  func.func @transform_0(%arg0: i32, %arg1: i32) -> (i32, i32, i32) {
    %c0_i32 = arith.constant 0 : i32
    %c0_i32_0 = arith.constant 0 : i32
    return %arg0, %c0_i32, %arg1 : i32, i32, i32
  }
  func.func @transform_1(%arg0: i32, %arg1: i32) -> (i32, i32) {
    %c0_i32 = arith.constant 0 : i32
    %c0_i32_0 = arith.constant 0 : i32
    %c0_i32_1 = arith.constant 0 : i32
    return %c0_i32, %c0_i32_0 : i32, i32
  }
  func.func @transform_2(%arg0: i32, %arg1: i32) -> (i32, i32) {
    %c0_i32 = arith.constant 0 : i32
    %c0_i32_0 = arith.constant 0 : i32
    %c0_i32_1 = arith.constant 0 : i32
    return %c0_i32, %c0_i32_0 : i32, i32
  }
  func.func @transform_3(%arg0: i32, %arg1: i32) -> (i32, i32, i32) {
    %c0_i32 = arith.constant 0 : i32
    %c0_i32_0 = arith.constant 0 : i32
    return %arg0, %c0_i32, %arg1 : i32, i32, i32
  }
}

</mosaic_0001>

<llo_original>
// kernel: tpu_custom_call.1
$region0: #{tpu_custom_call.1}
  #allocation0 [shape = 'u32[]', space=smem, size = 0x4, offset = 0x4, fixed_abs, tag = 'smem constant byte address 0x4 - core index']
  #allocation1 [shape = 'u32[144,128]{1,0:T(1,128)}', space=vmem, size = 0x12000, scoped, tag = 'internal scratch']
  %s0 = inlined_call_operand.vmem [shape: f32[2,4,16], index: 0, kind: input, shape index: {}]
  %s1 = inlined_call_operand.vmem [shape: f32[8,4], index: 1, kind: input, shape index: {}]
  %s2 = inlined_call_operand.vmem [shape: f32[8,1], index: 2, kind: input, shape index: {}]
  %s3 = inlined_call_operand.hbm [shape: f32[2,8,16], index: 3, kind: output, shape index: {}]
  %s4 = sld [smem:[#allocation0]]
  $region45: #{tpu_custom_call.1} parent=0
    _
  %s6 = ssub.s32 1, %s4
  %s7 = scalar_select 0, %s6, %s4
  $region1: #{tpu_custom_call.1} parent=0
    #allocation2 [shape = 'u8[8192]{0}', space=vmem, size = 0x2000, scoped, tag = 'output window, operand 0']
    #allocation3 [shape = 's32[2]{0}', space=sflag, size = 0x8, scoped, tag = 'scoped memory for tpu_custom_call.1']
    %8 = vsyncpa [#allocation3], 0
    %s9 = scalar_lea.sflag [#allocation3], 1
    %10 = vsyncpa %s9, 0
    loop: start=0, step=1, limit=4
    $region2: #{tpu_custom_call.1} parent=1 // loop_pre_header
      _
    $region3: #{tpu_custom_call.1} parent=1 // loop_header
      %s12 = sphi 0, %s16
      %p13 = scmp.ge.s32.totalorder %s12, 4
      %s19 = sphi 0, %s31
      %s20 = sphi 0, %s27
      %s21 = sphi 0, %s19
      %s22 = sphi 0, %s20
      %s23 = sphi 0, %s21
      %s24 = sphi 0, %s22
      %s36 = sphi 0, %s38
      %s39 = sphi 0, %s36
      %s40 = sphi 0, %s39
      %s56 = sphi 0, %s40
      %s60 = sphi 0, %s60
      %s62 = sphi 0, %s60
      %s63 = sphi 0, %s62
      %s77 = sphi 0, %s63
      %s81 = sphi 0, %s81
      %s83 = sphi 0, %s81
      %s84 = sphi 0, %s83
      %s98 = sphi 0, %s84
      %s106 = sphi 0, %s108
      %s109 = sphi 0, %s106
      %s110 = sphi 0, %s109
      %s126 = sphi 0, %s110
    $region4: #{tpu_custom_call.1} parent=1 // loop_header_branch
      %15 = sbr.rel (%p13) target = $region8
    $region5: #{tpu_custom_call.1} parent=1 // loop_body
      %s17 = ssub.s32 %s12, 1
      %s18 = ssub.s32 %s12, 2
      %s25 = sadd.s32 1, %s20
      %p26 = scmp.ge.s32.totalorder %s25, 1
      %s27 = scalar_select %p26, 0, %s25
      %s28 = sadd.s32 1, %s19
      %s29 = scalar_select %p26, %s28, %s19
      %p30 = scmp.ge.s32.totalorder %s29, 2
      %s31 = scalar_select %p30, 0, %s29
      %s32 = ssub.s32 %s19, %s31
      %s33 = ssub.s32 %s20, %s27
      %s34 = sor.u32 %s32, %s33
      %p35 = scmp.eq.s32.totalorder %s34, 0
      %s37 = sadd.s32 %s36, 1
      %s38 = scalar_select %p35, %s36, %s37
      %p41 = pneg %p35
      %p42 = scmp.eq.s32.totalorder %s12, 1
      %p43 = por %p41, %p42
      %p44 = scmp.ne.s32.totalorder %s36, %s39
      %p45 = scmp.eq.s32.totalorder %s12, 0
      %p46 = por %p44, %p45
      %p47 = scmp.ne.s32.totalorder %s36, %s39
      %p48 = scmp.eq.s32.totalorder %s17, 1
      %p49 = por %p47, %p48
      %p50 = scmp.ne.s32.totalorder %s39, %s40
      %p51 = scmp.eq.s32.totalorder %s17, 0
      %p52 = por %p50, %p51
      %p53 = scmp.ne.s32.totalorder %s39, %s40
      %p54 = scmp.eq.s32.totalorder %s18, 1
      %p55 = por %p53, %p54
      %p57 = scmp.ne.s32.totalorder %s40, %s56
      %p58 = scmp.eq.s32.totalorder %s18, 0
      %p59 = por %p57, %p58
      %s61 = sadd.s32 %s60, 1
      %p64 = scmp.eq.s32.totalorder %s12, 1
      %p65 = scmp.ne.s32.totalorder %s60, %s62
      %p66 = scmp.eq.s32.totalorder %s12, 0
      %p67 = por %p65, %p66
      %p68 = scmp.ne.s32.totalorder %s60, %s62
      %p69 = scmp.eq.s32.totalorder %s17, 1
      %p70 = por %p68, %p69
      %p71 = scmp.ne.s32.totalorder %s62, %s63
      %p72 = scmp.eq.s32.totalorder %s17, 0
      %p73 = por %p71, %p72
      %p74 = scmp.ne.s32.totalorder %s62, %s63
      %p75 = scmp.eq.s32.totalorder %s18, 1
      %p76 = por %p74, %p75
      %p78 = scmp.ne.s32.totalorder %s63, %s77
      %p79 = scmp.eq.s32.totalorder %s18, 0
      %p80 = por %p78, %p79
      %s82 = sadd.s32 %s81, 1
      %p85 = scmp.eq.s32.totalorder %s12, 1
      %p86 = scmp.ne.s32.totalorder %s81, %s83
      %p87 = scmp.eq.s32.totalorder %s12, 0
      %p88 = por %p86, %p87
      %p89 = scmp.ne.s32.totalorder %s81, %s83
      %p90 = scmp.eq.s32.totalorder %s17, 1
      %p91 = por %p89, %p90
      %p92 = scmp.ne.s32.totalorder %s83, %s84
      %p93 = scmp.eq.s32.totalorder %s17, 0
      %p94 = por %p92, %p93
      %p95 = scmp.ne.s32.totalorder %s83, %s84
      %p96 = scmp.eq.s32.totalorder %s18, 1
      %p97 = por %p95, %p96
      %p99 = scmp.ne.s32.totalorder %s84, %s98
      %p100 = scmp.eq.s32.totalorder %s18, 0
      %p101 = por %p99, %p100
      %s102 = ssub.s32 %s19, %s31
      %s103 = ssub.s32 %s20, %s27
      %s104 = sor.u32 %s102, %s103
      %p105 = scmp.eq.s32.totalorder %s104, 0
      %s107 = sadd.s32 %s106, 1
      %s108 = scalar_select %p105, %s106, %s107
      %p111 = pneg %p105
      %p112 = scmp.eq.s32.totalorder %s12, 1
      %p113 = por %p111, %p112
      %p114 = scmp.ne.s32.totalorder %s106, %s109
      %p115 = scmp.eq.s32.totalorder %s12, 0
      %p116 = por %p114, %p115
      %p117 = scmp.ne.s32.totalorder %s106, %s109
      %p118 = scmp.eq.s32.totalorder %s17, 1
      %p119 = por %p117, %p118
      %p120 = scmp.ne.s32.totalorder %s109, %s110
      %p121 = scmp.eq.s32.totalorder %s17, 0
      %p122 = por %p120, %p121
      %p123 = scmp.ne.s32.totalorder %s109, %s110
      %p124 = scmp.eq.s32.totalorder %s18, 1
      %p125 = por %p123, %p124
      %p127 = scmp.ne.s32.totalorder %s110, %s126
      %p128 = scmp.eq.s32.totalorder %s18, 0
      %p129 = por %p127, %p128
      %p130 = scmp.le.s32.totalorder 1, %s12
      %p131 = scmp.lt.s32.totalorder %s12, 3
      %p132 = pnand %p130, %p131
      %p133 = pneg %p132
      // Predicated region
      $region9: #{tpu_custom_call.1} parent=5 // pred_check
        _
      $region10: #{tpu_custom_call.1} parent=5 // pred_check_branch
        %135 = sbr.rel (%p132) target = $region12
      $region11: #{tpu_custom_call.1} parent=5 // pred_region
        %s136 = ssub.s32 %s12, 1
        // Predicated region
        $region13: #{tpu_custom_call.1} parent=11 // pred_check
          %p137 = pneg %p73
        $region14: #{tpu_custom_call.1} parent=11 // pred_check_branch
          %139 = sbr.rel (%p137) target = $region16
        $region15: #{tpu_custom_call.1} parent=11 // pred_region
          _
        $region16: #{tpu_custom_call.1} parent=11 // pred_fallthru
          _
        // Predicated region
        $region17: #{tpu_custom_call.1} parent=11 // pred_check
          %p140 = pneg %p94
        $region18: #{tpu_custom_call.1} parent=11 // pred_check_branch
          %142 = sbr.rel (%p140) target = $region20
        $region19: #{tpu_custom_call.1} parent=11 // pred_region
          _
        $region20: #{tpu_custom_call.1} parent=11 // pred_fallthru
          _
      $region12: #{tpu_custom_call.1} parent=5 // pred_fallthru
        _
      %p143 = scmp.lt.s32.totalorder %s12, 2
      // Predicated region
      $region21: #{tpu_custom_call.1} parent=5 // pred_check
        %p144 = pneg %p143
      $region22: #{tpu_custom_call.1} parent=5 // pred_check_branch
        %146 = sbr.rel (%p144) target = $region24
      $region23: #{tpu_custom_call.1} parent=5 // pred_region
        // Predicated region
        $region25: #{tpu_custom_call.1} parent=23 // pred_check
          %p147 = pneg %p46
        $region26: #{tpu_custom_call.1} parent=23 // pred_check_branch
          %149 = sbr.rel (%p147) target = $region28
        $region27: #{tpu_custom_call.1} parent=23 // pred_region
          %p150 = scmp.lt.s32.totalorder %s19, 1
          %s151 = scalar_select %p150, %s19, 1
          %p152 = scmp.lt.s32.totalorder %s20, 0
          %s153 = scalar_select %p152, %s20, 0
          %s154 = sadd.s32 %s153, %s151
          %s155 = smul.addr %s154, 4
          %s156 = scalar_lea.vmem %s0, %s155
        $region28: #{tpu_custom_call.1} parent=23 // pred_fallthru
          _
      $region24: #{tpu_custom_call.1} parent=5 // pred_fallthru
        _
      %p157 = scmp.le.s32.totalorder 1, %s12
      %p158 = scmp.lt.s32.totalorder %s12, 3
      %p159 = pnand %p157, %p158
      %p160 = pneg %p159
      // Predicated region
      $region29: #{tpu_custom_call.1} parent=5 // pred_check
        _
      $region30: #{tpu_custom_call.1} parent=5 // pred_check_branch
        %162 = sbr.rel (%p159) target = $region32
      $region31: #{tpu_custom_call.1} parent=5 // pred_region
        %s163 = ssub.s32 %s12, 1
        %p164 = scmp.lt.s32.totalorder %s21, 1
        %s165 = scalar_select %p164, %s21, 1
        %p166 = scmp.lt.s32.totalorder %s22, 0
        %s167 = scalar_select %p166, %s22, 0
        %s168 = sadd.s32 %s167, %s165
        %s169 = smul.addr %s168, 4
        %s170 = scalar_lea.vmem %s0, %s169
        %p171 = pneg %p52
        %p172 = pneg %p49
        %p173 = pneg %p73
        %p174 = pneg %p70
        %p175 = pneg %p94
        %p176 = pneg %p91
        %p177 = pneg %p122
        %p178 = pneg %p119
        %s179 = sand.u32 %s109, 1
        %s180 = scalar_lea.sflag [#allocation3], %s179
        %s181 = sand.u32 %s109, 1
        %s182 = smul.addr %s181, 8
        %s183 = scalar_lea.vmem [#allocation2], %s182
        %p184 = scmp.lt.s32.totalorder %s21, 1
        %s185 = scalar_select %p184, %s21, 1
        %p186 = scmp.lt.s32.totalorder %s22, 0
        %s187 = scalar_select %p186, %s22, 0
        %s188 = sadd.s32 %s187, %s185
        %s189 = smul.addr %s188, 4
        %s190 = scalar_lea.vmem %s0, %s189
        %v191 = vld [vmem:[%s1] sm:$0xff]
        %v192 = vld [vmem:[%s190] sm:$0xf]
        %v193 = vld [vmem:[%s2] sm:$0xff]
        %195 = vset.pattern.permute.xlu0 0
        %196 = vperm.xlu0 %195, %v193
        %v197 = vpop.permute.xlu0 %196
        %vm199 = vcmask 31744
        %v201 = vsel %vm199, %v191, 0
        %vm203 = vcmask 1043456
        %v205 = vsel %vm203, %v192, 0
        %207 = vmatprep.subr.mxu0 0.0
        %208 = vmatpush1.msra.mxu0 %v205
        %209 = vmatprep.subr.mxu0 0.0
        %210 = vmatpush1.msra.mxu0 0.0
        %211 = vmatprep.subr.mxu0 0.0
        %212 = vmatpush1.msra.mxu0 0.0
        %213 = vmatprep.subr.mxu0 0.0
        %214 = vmatpush1.msra.mxu0 0.0
        %215 = vmatprep.subr.mxu0 0.0
        %216 = vmatpush1.msra.mxu0 0.0
        %217 = vmatprep.subr.mxu0 0.0
        %218 = vmatpush1.msra.mxu0 0.0
        %219 = vmatprep.subr.mxu0 0.0
        %220 = vmatpush1.msra.mxu0 0.0
        %221 = vmatprep.subr.mxu0 0.0
        %222 = vmatpush1.msra.mxu0 0.0
        %223 = vmatprep.subr.mxu0 0.0
        %224 = vmatpush1.msra.mxu0 0.0
        %225 = vmatprep.subr.mxu0 0.0
        %226 = vmatpush1.msra.mxu0 0.0
        %227 = vmatprep.subr.mxu0 0.0
        %228 = vmatpush1.msra.mxu0 0.0
        %229 = vmatprep.subr.mxu0 0.0
        %230 = vmatpush1.msra.mxu0 0.0
        %231 = vmatprep.subr.mxu0 0.0
        %232 = vmatpush1.msra.mxu0 0.0
        %233 = vmatprep.subr.mxu0 0.0
        %234 = vmatpush1.msra.mxu0 0.0
        %235 = vmatprep.subr.mxu0 0.0
        %236 = vmatpush1.msra.mxu0 0.0
        %237 = vmatprep.subr.mxu0 0.0
        %238 = vmatpush1.msra.mxu0 0.0
        %239 = vmatprep.subr.mxu0 0.0
        %240 = vmatpush1.msra.mxu0 0.0
        %241 = vmatprep.subr.mxu0 0.0
        %242 = vmatpush1.msra.mxu0 0.0
        %243 = vmatprep.subr.mxu0 0.0
        %244 = vmatpush1.msra.mxu0 0.0
        %245 = vmatprep.subr.mxu0 0.0
        %246 = vmatpush1.msra.mxu0 0.0
        %247 = vmatprep.subr.mxu0 0.0
        %248 = vmatpush1.msra.mxu0 0.0
        %249 = vmatprep.subr.mxu0 0.0
        %250 = vmatpush1.msra.mxu0 0.0
        %251 = vmatprep.subr.mxu0 0.0
        %252 = vmatpush1.msra.mxu0 0.0
        %253 = vmatprep.subr.mxu0 0.0
        %254 = vmatpush1.msra.mxu0 0.0
        %255 = vmatprep.subr.mxu0 0.0
        %256 = vmatpush1.msra.mxu0 0.0
        %257 = vmatprep.subr.mxu0 0.0
        %258 = vmatpush1.msra.mxu0 0.0
        %259 = vmatprep.subr.mxu0 0.0
        %260 = vmatpush1.msra.mxu0 0.0
        %261 = vmatprep.subr.mxu0 0.0
        %262 = vmatpush1.msra.mxu0 0.0
        %263 = vmatprep.subr.mxu0 0.0
        %264 = vmatpush1.msra.mxu0 0.0
        %265 = vmatprep.subr.mxu0 0.0
        %266 = vmatpush1.msra.mxu0 0.0
        %267 = vmatprep.subr.mxu0 0.0
        %268 = vmatpush1.msra.mxu0 0.0
        %269 = vmatprep.subr.mxu0 0.0
        %270 = vmatpush1.msra.mxu0 0.0
        %271 = vmatprep.mubr.f32.mxu0 0.0
        %272 = vmatmul.mubr.f32.gmra.mrb[0].mxu0 %v201
        %v273 = vpop.f32.mrb[0].mxu0
        %v274 = vadd.f32 %v197, %v273
        %v275 = vpop.f32.mrb[0].mxu0
        %276 = vdwg.mxu0
        %vm277 = vcmask 130048
        %278 = vst.msk [vmem:[%s183] sm:$0xff] %vm277, %v274
        %s279 = sand.u32 %s109, 1
        %s280 = scalar_lea.sflag [#allocation3], %s279
        %s281 = sand.u32 %s109, 1
        %s282 = smul.addr %s281, 8
        %s283 = scalar_lea.vmem [#allocation2], %s282
        // Predicated region
        $region33: #{tpu_custom_call.1} parent=31 // pred_check
          %p284 = pneg %p119
        $region34: #{tpu_custom_call.1} parent=31 // pred_check_branch
          %286 = sbr.rel (%p284) target = $region36
        $region35: #{tpu_custom_call.1} parent=31 // pred_region
          %s288 = ssub.s32 128, 128
          %289 = vsyncadd %s280, %s288
          %s290 = sadd.s32 %s22, %s21
          %s291 = smul.addr %s290, 128
          %s292 = scalar_lea.hbm %s3, %s291
          %s294 = sshll.u32 %s283, 4
          %s295 = int_to_ptr.vmem [resolvable:$true] %s294
          %297 = dma.vmem_to_hbm [thread:$0]  %s295, 128, %s292, %s280
        $region36: #{tpu_custom_call.1} parent=31 // pred_fallthru
          _
      $region32: #{tpu_custom_call.1} parent=5 // pred_fallthru
        _
      %p298 = scmp.le.s32.totalorder 2, %s12
      // Predicated region
      $region37: #{tpu_custom_call.1} parent=5 // pred_check
        %p299 = pneg %p298
      $region38: #{tpu_custom_call.1} parent=5 // pred_check_branch
        %301 = sbr.rel (%p299) target = $region40
      $region39: #{tpu_custom_call.1} parent=5 // pred_region
        %s302 = ssub.s32 %s12, 2
        // Predicated region
        $region41: #{tpu_custom_call.1} parent=39 // pred_check
          %p303 = pneg %p125
        $region42: #{tpu_custom_call.1} parent=39 // pred_check_branch
          %305 = sbr.rel (%p303) target = $region44
        $region43: #{tpu_custom_call.1} parent=39 // pred_region
          %s306 = sand.u32 %s110, 1
          %s307 = scalar_lea.sflag [#allocation3], %s306
          %s308 = sand.u32 %s110, 1
          %s309 = smul.addr %s308, 8
          %s310 = scalar_lea.vmem [#allocation2], %s309
          %311 = dma.done %s307, 128
        $region44: #{tpu_custom_call.1} parent=39 // pred_fallthru
          _
      $region40: #{tpu_custom_call.1} parent=5 // pred_fallthru
        _
    $region6: #{tpu_custom_call.1} parent=1 // loop_footer
      %s16 = sadd.s32 1, %s12
    $region7: #{tpu_custom_call.1} parent=1 // loop_footer_branch
      %11 = sbr.rel target = $region3
    $region8: #{tpu_custom_call.1} parent=1 // loop_exit
      _
    %312 = vsyncpa [#allocation3], 1
    %s313 = scalar_lea.sflag [#allocation3], 1
    %314 = vsyncpa %s313, 1

</llo_original>
